<compile_context>
chip_gen: v7x
topology: tpu7x:2x2x1
jax: 0.10.0
libtpu: 0.0.40
codegen_flags: <defaults>
</compile_context>

<pallas_src>
import functools

import jax
import jax.numpy as jnp
from jax.experimental import pallas as pl
from jax.experimental.pallas import tpu as pltpu

IN_FEATURES = 925
HIDDEN = 100
OUT_FEATURES = 1

K_PAD = 1024   # 925 -> 1024 : 8 full 128-lane vregs along the contraction dim
H_PAD = 128    # 100 -> 128  : lane-dense hidden activations


def _round_up(n, m):
    return ((n + m - 1) // m) * m


def mlp_kernel(x_ref, w1_ref, b1_ref, w2_ref, b2_ref, o_ref):
    # Layer 1 on the MXU: bf16 operands, f32 accumulation -> (TM, 128) f32.
    h = jnp.dot(x_ref[...], w1_ref[...], preferred_element_type=jnp.float32)
    # Bias + ReLU in f32 on the VPU (padded hidden columns are killed by the
    # zero rows of w2 below, so their bias value is irrelevant; it is 0 anyway).
    h = jnp.maximum(h + b1_ref[...], 0.0)
    # Layer 2 (hidden -> 1): elementwise multiply + cross-lane reduction
    # instead of an N=1 MXU matmul.
    out = jnp.sum(h * w2_ref[...], axis=-1, keepdims=True) + b2_ref[...]
    o_ref[...] = out.astype(o_ref.dtype)


@functools.partial(jax.jit, static_argnames=("block_m",))
def mlp_forward(x, w1, b1, w2, b2, *, block_m=512):
    """Forward pass of Linear(925,100) -> ReLU -> Linear(100,1).

    x:  (B, 925) f32
    w1: (925, 100) f32  (transposed vs. PyTorch's (out, in) storage)
    b1: (1, 100)  f32
    w2: (100, 1)  f32
    b2: (1, 1)    f32
    returns (B, 1) f32
    """
    B = x.shape[0]

    # Batch tile: multiple of 8 sublanes, capped at block_m.
    tm = min(block_m, _round_up(B, 8))
    b_pad = _round_up(B, tm)
    grid = (b_pad // tm,)

    # Zero-pad everything to tile-aligned shapes; cast matmul operands to bf16.
    x_p = jnp.zeros((b_pad, K_PAD), jnp.bfloat16).at[:B, :IN_FEATURES].set(
        x.astype(jnp.bfloat16))
    w1_p = jnp.zeros((K_PAD, H_PAD), jnp.bfloat16).at[:IN_FEATURES, :HIDDEN].set(
        w1.astype(jnp.bfloat16))
    b1_p = jnp.zeros((1, H_PAD), jnp.float32).at[:, :HIDDEN].set(
        b1.reshape(1, HIDDEN).astype(jnp.float32))
    w2_p = jnp.zeros((1, H_PAD), jnp.float32).at[:, :HIDDEN].set(
        w2.reshape(1, HIDDEN).astype(jnp.float32))
    b2_p = b2.reshape(1, 1).astype(jnp.float32)

    # VMEM budget: double-buffered bf16 x tiles + resident (double-buffered)
    # params + f32 output tiles, with headroom.  Clamped well under v7x's
    # 64 MiB physical VMEM.
    vmem_bytes = (2 * tm * K_PAD * 2                       # x tiles (bf16)
                  + 2 * (K_PAD * H_PAD * 2 + 2 * H_PAD * 4 + 4)  # params
                  + 2 * tm * OUT_FEATURES * 4)             # output tiles (f32)
    vmem_limit = min(48 << 20, max(int(vmem_bytes * 2), 32 << 20))

    out_p = pl.pallas_call(
        mlp_kernel,
        out_shape=jax.ShapeDtypeStruct((b_pad, OUT_FEATURES), jnp.float32),
        grid_spec=pltpu.PrefetchScalarGridSpec(
            num_scalar_prefetch=0,
            grid=grid,
            in_specs=[
                pl.BlockSpec((tm, K_PAD), lambda i: (i, 0)),     # x tile
                pl.BlockSpec((K_PAD, H_PAD), lambda i: (0, 0)),  # w1 resident
                pl.BlockSpec((1, H_PAD), lambda i: (0, 0)),      # b1 resident
                pl.BlockSpec((1, H_PAD), lambda i: (0, 0)),      # w2 row resident
                pl.BlockSpec((1, 1), lambda i: (0, 0)),          # b2 resident
            ],
            out_specs=pl.BlockSpec((tm, OUT_FEATURES), lambda i: (i, 0)),
        ),
        compiler_params=pltpu.CompilerParams(
            dimension_semantics=("parallel",),
            vmem_limit_bytes=vmem_limit,
        ),
    )(x_p, w1_p, b1_p, w2_p, b2_p)

    return out_p[:B]


def init_params(key):
    """Deterministic init matching PyTorch Linear shapes (W stored as (in, out))."""
    k1, k2, k3, k4 = jax.random.split(key, 4)
    lim1 = 1.0 / jnp.sqrt(jnp.float32(IN_FEATURES))
    lim2 = 1.0 / jnp.sqrt(jnp.float32(HIDDEN))
    w1 = jax.random.uniform(k1, (IN_FEATURES, HIDDEN), jnp.float32, -lim1, lim1)
    b1 = jax.random.uniform(k2, (1, HIDDEN), jnp.float32, -lim1, lim1)
    w2 = jax.random.uniform(k3, (HIDDEN, OUT_FEATURES), jnp.float32, -lim2, lim2)
    b2 = jax.random.uniform(k4, (1, OUT_FEATURES), jnp.float32, -lim2, lim2)
    return w1, b1, w2, b2


if __name__ == "__main__":
    key = jax.random.PRNGKey(0)
    k_params, k_x = jax.random.split(key)

    w1, b1, w2, b2 = init_params(k_params)

    B = 8
    x = jax.random.normal(k_x, (B, IN_FEATURES), jnp.float32)

    out = mlp_forward(x, w1, b1, w2, b2)
    out = jax.block_until_ready(out)

    # Reference in plain f32 JAX (same math as the PyTorch module).  bf16
    # matmul operands with f32 accumulation stay well within this tolerance.
    ref = jnp.maximum(x @ w1 + b1, 0.0) @ w2 + b2
    assert out.shape == (B, OUT_FEATURES)
    assert jnp.allclose(out, ref, atol=5e-2, rtol=5e-2), float(
        jnp.max(jnp.abs(out - ref)))

    print("KERNEL_OK")
</pallas_src>

<mosaic_0001>
module attributes {stable_mosaic.version = 11 : i64} {
  func.func @mlp_kernel(%arg0: i32, %arg1: memref<8x1024xbf16, #tpu.memory_space<vmem>>, %arg2: memref<1024x128xbf16, #tpu.memory_space<vmem>>, %arg3: memref<1x128xf32, #tpu.memory_space<vmem>>, %arg4: memref<1x128xf32, #tpu.memory_space<vmem>>, %arg5: memref<1x1xf32, #tpu.memory_space<vmem>>, %arg6: memref<8x1xf32, #tpu.memory_space<vmem>>) attributes {dimension_semantics = [#tpu.dimension_semantics<parallel>], iteration_bounds = array<i64: 1>, scalar_prefetch = 0 : i64, scratch_operands = 0 : i64, tpu.core_type = #tpu.core_type<tc>, window_params = [{transform_indices = @transform_0, window_bounds = array<i64: 8, 1024>}, {pipeline_mode = #tpu.pipeline_mode<synchronous>, transform_indices = @transform_1, window_bounds = array<i64: 1024, 128>}, {pipeline_mode = #tpu.pipeline_mode<synchronous>, transform_indices = @transform_2, window_bounds = array<i64: 1, 128>}, {pipeline_mode = #tpu.pipeline_mode<synchronous>, transform_indices = @transform_3, window_bounds = array<i64: 1, 128>}, {pipeline_mode = #tpu.pipeline_mode<synchronous>, transform_indices = @transform_4, window_bounds = array<i64: 1, 1>}, {transform_indices = @transform_5, window_bounds = array<i64: 8, 1>}]} {
    %c0 = arith.constant 0 : index
    %c0_0 = arith.constant 0 : index
    %0 = vector.load %arg1[%c0, %c0_0] : memref<8x1024xbf16, #tpu.memory_space<vmem>>, vector<8x1024xbf16>
    %c0_1 = arith.constant 0 : index
    %c0_2 = arith.constant 0 : index
    %1 = vector.load %arg2[%c0_1, %c0_2] : memref<1024x128xbf16, #tpu.memory_space<vmem>>, vector<1024x128xbf16>
    %cst = arith.constant dense<0.000000e+00> : vector<8x128xf32>
    %2 = tpu.matmul %0, %1, %cst {dimension_numbers = #tpu.dot_dimension_numbers<[1], [0], [0], [1], [0, 0, 1, 1], [], []>} : vector<8x1024xbf16>, vector<1024x128xbf16>, vector<8x128xf32> -> vector<8x128xf32>
    %c0_3 = arith.constant 0 : index
    %c0_4 = arith.constant 0 : index
    %3 = vector.load %arg3[%c0_3, %c0_4] : memref<1x128xf32, #tpu.memory_space<vmem>>, vector<1x128xf32>
    %4 = vector.broadcast %3 : vector<1x128xf32> to vector<8x128xf32>
    %5 = arith.addf %2, %4 : vector<8x128xf32>
    %cst_5 = arith.constant 0.000000e+00 : f32
    %6 = vector.broadcast %cst_5 : f32 to vector<8x128xf32>
    %7 = arith.maximumf %5, %6 : vector<8x128xf32>
    %c0_6 = arith.constant 0 : index
    %c0_7 = arith.constant 0 : index
    %8 = vector.load %arg4[%c0_6, %c0_7] : memref<1x128xf32, #tpu.memory_space<vmem>>, vector<1x128xf32>
    %9 = vector.broadcast %8 : vector<1x128xf32> to vector<8x128xf32>
    %10 = arith.mulf %7, %9 : vector<8x128xf32>
    %cst_8 = arith.constant dense<0.000000e+00> : vector<8xf32>
    %11 = vector.multi_reduction <add>, %10, %cst_8 [1] : vector<8x128xf32> to vector<8xf32>
    %12 = vector.shape_cast %11 : vector<8xf32> to vector<8x1xf32>
    %c0_9 = arith.constant 0 : index
    %c0_10 = arith.constant 0 : index
    %13 = vector.load %arg5[%c0_9, %c0_10] : memref<1x1xf32, #tpu.memory_space<vmem>>, vector<1x1xf32>
    %14 = vector.broadcast %13 : vector<1x1xf32> to vector<8x1xf32>
    %15 = arith.addf %12, %14 : vector<8x1xf32>
    %c0_11 = arith.constant 0 : index
    %c0_12 = arith.constant 0 : index
    %16 = vector.load %arg6[%c0_11, %c0_12] : memref<8x1xf32, #tpu.memory_space<vmem>>, vector<8x1xf32>
    tpu.vector_store %arg6[%c0_11, %c0_12], %15 {strides = array<i32>} : memref<8x1xf32, #tpu.memory_space<vmem>>, vector<8x1xf32>,
    return
  }
  func.func @transform_0(%arg0: i32) -> (i32, i32) {
    %c0_i32 = arith.constant 0 : i32
    %c0_i32_0 = arith.constant 0 : i32
    return %arg0, %c0_i32 : i32, i32
  }
  func.func @transform_1(%arg0: i32) -> (i32, i32) {
    %c0_i32 = arith.constant 0 : i32
    %c0_i32_0 = arith.constant 0 : i32
    %c0_i32_1 = arith.constant 0 : i32
    return %c0_i32, %c0_i32_0 : i32, i32
  }
  func.func @transform_2(%arg0: i32) -> (i32, i32) {
    %c0_i32 = arith.constant 0 : i32
    %c0_i32_0 = arith.constant 0 : i32
    %c0_i32_1 = arith.constant 0 : i32
    return %c0_i32, %c0_i32_0 : i32, i32
  }
  func.func @transform_3(%arg0: i32) -> (i32, i32) {
    %c0_i32 = arith.constant 0 : i32
    %c0_i32_0 = arith.constant 0 : i32
    %c0_i32_1 = arith.constant 0 : i32
    return %c0_i32, %c0_i32_0 : i32, i32
  }
  func.func @transform_4(%arg0: i32) -> (i32, i32) {
    %c0_i32 = arith.constant 0 : i32
    %c0_i32_0 = arith.constant 0 : i32
    %c0_i32_1 = arith.constant 0 : i32
    return %c0_i32, %c0_i32_0 : i32, i32
  }
  func.func @transform_5(%arg0: i32) -> (i32, i32) {
    %c0_i32 = arith.constant 0 : i32
    %c0_i32_0 = arith.constant 0 : i32
    return %arg0, %c0_i32 : i32, i32
  }
}

</mosaic_0001>

<llo_original>
// kernel: mlp_forward.1
$region0: #{mlp_forward.1}
  #allocation0 [shape = 'u32[]', space=smem, size = 0x4, offset = 0x4, fixed_abs, tag = 'smem constant byte address 0x4 - core index']
  #allocation1 [shape = 'u32[144,128]{1,0:T(1,128)}', space=vmem, size = 0x12000, scoped, tag = 'internal scratch']
  #allocation2 [shape = 'f32[1,1]{1,0:T(1,128)S(1)}', space=vmem, size = 0x200, scoped, tag = 'scoped memory for mlp_forward.1']
  %s0 = inlined_call_operand.vmem [shape: bf16[8,1024], index: 0, kind: input, shape index: {}]
  %s1 = inlined_call_operand.vmem [shape: bf16[1024,128], index: 1, kind: input, shape index: {}]
  %s2 = inlined_call_operand.vmem [shape: f32[1,128], index: 2, kind: input, shape index: {}]
  %s3 = inlined_call_operand.vmem [shape: f32[1,128], index: 3, kind: input, shape index: {}]
  %s4 = inlined_call_operand.<no memory space> [shape: f32[1,1], index: 4, kind: input, shape index: {}]
  %s5 = inlined_call_operand.vmem [shape: f32[8,1], index: 5, kind: output, shape index: {}]
  %s6 = sld [smem:[#allocation0]]
  $region30: #{mlp_forward.1} parent=0
    _
  %s8 = ssub.s32 1, %s6
  %s9 = scalar_select 0, %s8, %s6
  %v10 = vstv %s4
  %11 = vst [vmem:[#allocation2] sm:$0x1] %v10
  // Predicated region
  $region2: #{mlp_forward.1} parent=0 // pred_check
    _
  $region3: #{mlp_forward.1} parent=0 // pred_check_branch
    %13 = sbr.rel (0) target = $region5
  $region4: #{mlp_forward.1} parent=0 // pred_region
    _
  $region5: #{mlp_forward.1} parent=0 // pred_fallthru
    _
  // Predicated region
  $region6: #{mlp_forward.1} parent=0 // pred_check
    _
  $region7: #{mlp_forward.1} parent=0 // pred_check_branch
    %15 = sbr.rel (0) target = $region9
  $region8: #{mlp_forward.1} parent=0 // pred_region
    _
  $region9: #{mlp_forward.1} parent=0 // pred_fallthru
    _
  // Predicated region
  $region10: #{mlp_forward.1} parent=0 // pred_check
    _
  $region11: #{mlp_forward.1} parent=0 // pred_check_branch
    %17 = sbr.rel (0) target = $region13
  $region12: #{mlp_forward.1} parent=0 // pred_region
    _
  $region13: #{mlp_forward.1} parent=0 // pred_fallthru
    _
  // Predicated region
  $region14: #{mlp_forward.1} parent=0 // pred_check
    _
  $region15: #{mlp_forward.1} parent=0 // pred_check_branch
    %19 = sbr.rel (0) target = $region17
  $region16: #{mlp_forward.1} parent=0 // pred_region
    _
  $region17: #{mlp_forward.1} parent=0 // pred_fallthru
    _
  // Predicated region
  $region18: #{mlp_forward.1} parent=0 // pred_check
    _
  $region19: #{mlp_forward.1} parent=0 // pred_check_branch
    %21 = sbr.rel (0) target = $region21
  $region20: #{mlp_forward.1} parent=0 // pred_region
    _
  $region21: #{mlp_forward.1} parent=0 // pred_fallthru
    _
  %v23 = vld [vmem:[%s0] sm:$0xff]
  %v24 = vld [vmem:[%s0 + $0x8] sm:$0xff]
  %v25 = vld [vmem:[%s0 + $0x10] sm:$0xff]
  %v26 = vld [vmem:[%s0 + $0x18] sm:$0xff]
  %v27 = vld [vmem:[%s1] sm:$0xf]
  %v28 = vld [vmem:[%s1 + $0x4] sm:$0xf]
  %v29 = vld [vmem:[%s1 + $0x8] sm:$0xf]
  %v30 = vld [vmem:[%s1 + $0xc] sm:$0xf]
  %v31 = vld [vmem:[%s1 + $0x10] sm:$0xf]
  %v32 = vld [vmem:[%s1 + $0x14] sm:$0xf]
  %v33 = vld [vmem:[%s1 + $0x18] sm:$0xf]
  %v34 = vld [vmem:[%s1 + $0x1c] sm:$0xf]
  %v35 = vld [vmem:[%s1 + $0x20] sm:$0xf]
  %v36 = vld [vmem:[%s1 + $0x24] sm:$0xf]
  %v37 = vld [vmem:[%s1 + $0x28] sm:$0xf]
  %v38 = vld [vmem:[%s1 + $0x2c] sm:$0xf]
  %v39 = vld [vmem:[%s1 + $0x30] sm:$0xf]
  %v40 = vld [vmem:[%s1 + $0x34] sm:$0xf]
  %v41 = vld [vmem:[%s1 + $0x38] sm:$0xf]
  %v42 = vld [vmem:[%s1 + $0x3c] sm:$0xf]
  %v43 = vld [vmem:[%s1 + $0x40] sm:$0xf]
  %v44 = vld [vmem:[%s1 + $0x44] sm:$0xf]
  %v45 = vld [vmem:[%s1 + $0x48] sm:$0xf]
  %v46 = vld [vmem:[%s1 + $0x4c] sm:$0xf]
  %v47 = vld [vmem:[%s1 + $0x50] sm:$0xf]
  %v48 = vld [vmem:[%s1 + $0x54] sm:$0xf]
  %v49 = vld [vmem:[%s1 + $0x58] sm:$0xf]
  %v50 = vld [vmem:[%s1 + $0x5c] sm:$0xf]
  %v51 = vld [vmem:[%s1 + $0x60] sm:$0xf]
  %v52 = vld [vmem:[%s1 + $0x64] sm:$0xf]
  %v53 = vld [vmem:[%s1 + $0x68] sm:$0xf]
  %v54 = vld [vmem:[%s1 + $0x6c] sm:$0xf]
  %v55 = vld [vmem:[%s1 + $0x70] sm:$0xf]
  %v56 = vld [vmem:[%s1 + $0x74] sm:$0xf]
  %v57 = vld [vmem:[%s1 + $0x78] sm:$0xf]
  %v58 = vld [vmem:[%s1 + $0x7c] sm:$0xf]
  %v59 = vld [vmem:[%s1 + $0x80] sm:$0xf]
  %v60 = vld [vmem:[%s1 + $0x84] sm:$0xf]
  %v61 = vld [vmem:[%s1 + $0x88] sm:$0xf]
  %v62 = vld [vmem:[%s1 + $0x8c] sm:$0xf]
  %v63 = vld [vmem:[%s1 + $0x90] sm:$0xf]
  %v64 = vld [vmem:[%s1 + $0x94] sm:$0xf]
  %v65 = vld [vmem:[%s1 + $0x98] sm:$0xf]
  %v66 = vld [vmem:[%s1 + $0x9c] sm:$0xf]
  %v67 = vld [vmem:[%s1 + $0xa0] sm:$0xf]
  %v68 = vld [vmem:[%s1 + $0xa4] sm:$0xf]
  %v69 = vld [vmem:[%s1 + $0xa8] sm:$0xf]
  %v70 = vld [vmem:[%s1 + $0xac] sm:$0xf]
  %v71 = vld [vmem:[%s1 + $0xb0] sm:$0xf]
  %v72 = vld [vmem:[%s1 + $0xb4] sm:$0xf]
  %v73 = vld [vmem:[%s1 + $0xb8] sm:$0xf]
  %v74 = vld [vmem:[%s1 + $0xbc] sm:$0xf]
  %v75 = vld [vmem:[%s1 + $0xc0] sm:$0xf]
  %v76 = vld [vmem:[%s1 + $0xc4] sm:$0xf]
  %v77 = vld [vmem:[%s1 + $0xc8] sm:$0xf]
  %v78 = vld [vmem:[%s1 + $0xcc] sm:$0xf]
  %v79 = vld [vmem:[%s1 + $0xd0] sm:$0xf]
  %v80 = vld [vmem:[%s1 + $0xd4] sm:$0xf]
  %v81 = vld [vmem:[%s1 + $0xd8] sm:$0xf]
  %v82 = vld [vmem:[%s1 + $0xdc] sm:$0xf]
  %v83 = vld [vmem:[%s1 + $0xe0] sm:$0xf]
  %v84 = vld [vmem:[%s1 + $0xe4] sm:$0xf]
  %v85 = vld [vmem:[%s1 + $0xe8] sm:$0xf]
  %v86 = vld [vmem:[%s1 + $0xec] sm:$0xf]
  %v87 = vld [vmem:[%s1 + $0xf0] sm:$0xf]
  %v88 = vld [vmem:[%s1 + $0xf4] sm:$0xf]
  %v89 = vld [vmem:[%s1 + $0xf8] sm:$0xf]
  %v90 = vld [vmem:[%s1 + $0xfc] sm:$0xf]
  %v91 = vld [vmem:[%s1 + $0x100] sm:$0xf]
  %v92 = vld [vmem:[%s1 + $0x104] sm:$0xf]
  %v93 = vld [vmem:[%s1 + $0x108] sm:$0xf]
  %v94 = vld [vmem:[%s1 + $0x10c] sm:$0xf]
  %v95 = vld [vmem:[%s1 + $0x110] sm:$0xf]
  %v96 = vld [vmem:[%s1 + $0x114] sm:$0xf]
  %v97 = vld [vmem:[%s1 + $0x118] sm:$0xf]
  %v98 = vld [vmem:[%s1 + $0x11c] sm:$0xf]
  %v99 = vld [vmem:[%s1 + $0x120] sm:$0xf]
  %v100 = vld [vmem:[%s1 + $0x124] sm:$0xf]
  %v101 = vld [vmem:[%s1 + $0x128] sm:$0xf]
  %v102 = vld [vmem:[%s1 + $0x12c] sm:$0xf]
  %v103 = vld [vmem:[%s1 + $0x130] sm:$0xf]
  %v104 = vld [vmem:[%s1 + $0x134] sm:$0xf]
  %v105 = vld [vmem:[%s1 + $0x138] sm:$0xf]
  %v106 = vld [vmem:[%s1 + $0x13c] sm:$0xf]
  %v107 = vld [vmem:[%s1 + $0x140] sm:$0xf]
  %v108 = vld [vmem:[%s1 + $0x144] sm:$0xf]
  %v109 = vld [vmem:[%s1 + $0x148] sm:$0xf]
  %v110 = vld [vmem:[%s1 + $0x14c] sm:$0xf]
  %v111 = vld [vmem:[%s1 + $0x150] sm:$0xf]
  %v112 = vld [vmem:[%s1 + $0x154] sm:$0xf]
  %v113 = vld [vmem:[%s1 + $0x158] sm:$0xf]
  %v114 = vld [vmem:[%s1 + $0x15c] sm:$0xf]
  %v115 = vld [vmem:[%s1 + $0x160] sm:$0xf]
  %v116 = vld [vmem:[%s1 + $0x164] sm:$0xf]
  %v117 = vld [vmem:[%s1 + $0x168] sm:$0xf]
  %v118 = vld [vmem:[%s1 + $0x16c] sm:$0xf]
  %v119 = vld [vmem:[%s1 + $0x170] sm:$0xf]
  %v120 = vld [vmem:[%s1 + $0x174] sm:$0xf]
  %v121 = vld [vmem:[%s1 + $0x178] sm:$0xf]
  %v122 = vld [vmem:[%s1 + $0x17c] sm:$0xf]
  %v123 = vld [vmem:[%s1 + $0x180] sm:$0xf]
  %v124 = vld [vmem:[%s1 + $0x184] sm:$0xf]
  %v125 = vld [vmem:[%s1 + $0x188] sm:$0xf]
  %v126 = vld [vmem:[%s1 + $0x18c] sm:$0xf]
  %v127 = vld [vmem:[%s1 + $0x190] sm:$0xf]
  %v128 = vld [vmem:[%s1 + $0x194] sm:$0xf]
  %v129 = vld [vmem:[%s1 + $0x198] sm:$0xf]
  %v130 = vld [vmem:[%s1 + $0x19c] sm:$0xf]
  %v131 = vld [vmem:[%s1 + $0x1a0] sm:$0xf]
  %v132 = vld [vmem:[%s1 + $0x1a4] sm:$0xf]
  %v133 = vld [vmem:[%s1 + $0x1a8] sm:$0xf]
  %v134 = vld [vmem:[%s1 + $0x1ac] sm:$0xf]
  %v135 = vld [vmem:[%s1 + $0x1b0] sm:$0xf]
  %v136 = vld [vmem:[%s1 + $0x1b4] sm:$0xf]
  %v137 = vld [vmem:[%s1 + $0x1b8] sm:$0xf]
  %v138 = vld [vmem:[%s1 + $0x1bc] sm:$0xf]
  %v139 = vld [vmem:[%s1 + $0x1c0] sm:$0xf]
  %v140 = vld [vmem:[%s1 + $0x1c4] sm:$0xf]
  %v141 = vld [vmem:[%s1 + $0x1c8] sm:$0xf]
  %v142 = vld [vmem:[%s1 + $0x1cc] sm:$0xf]
  %v143 = vld [vmem:[%s1 + $0x1d0] sm:$0xf]
  %v144 = vld [vmem:[%s1 + $0x1d4] sm:$0xf]
  %v145 = vld [vmem:[%s1 + $0x1d8] sm:$0xf]
  %v146 = vld [vmem:[%s1 + $0x1dc] sm:$0xf]
  %v147 = vld [vmem:[%s1 + $0x1e0] sm:$0xf]
  %v148 = vld [vmem:[%s1 + $0x1e4] sm:$0xf]
  %v149 = vld [vmem:[%s1 + $0x1e8] sm:$0xf]
  %v150 = vld [vmem:[%s1 + $0x1ec] sm:$0xf]
  %v151 = vld [vmem:[%s1 + $0x1f0] sm:$0xf]
  %v152 = vld [vmem:[%s1 + $0x1f4] sm:$0xf]
  %v153 = vld [vmem:[%s1 + $0x1f8] sm:$0xf]
  %v154 = vld [vmem:[%s1 + $0x1fc] sm:$0xf]
  %v155 = vld [vmem:[%s2] sm:$0x1]
  %v157 = vlaneseq
  %v158 = vshrl.u32 %v157, 7
  %v159 = vsub.s32 0, %v158
  %v160 = vrot.slane %v155, %v159
  %v166 = vunpack.c.l.b16 %v23
  %v167 = vunpack.c.h.b16 %v23
  %v168 = vunpack.c.l.b16 %v24
  %v169 = vunpack.c.h.b16 %v24
  %v170 = vunpack.c.l.b16 %v25
  %v171 = vunpack.c.h.b16 %v25
  %v172 = vunpack.c.l.b16 %v26
  %v173 = vunpack.c.h.b16 %v26
  %v174 = vpack.c.b16 %v166, %v166
  %v175 = vpack.c.b16 %v167, %v167
  %v176 = vpack.c.b16 %v168, %v168
  %v177 = vpack.c.b16 %v169, %v169
  %v178 = vpack.c.b16 %v170, %v170
  %v179 = vpack.c.b16 %v171, %v171
  %v180 = vpack.c.b16 %v172, %v172
  %v181 = vpack.c.b16 %v173, %v173
  %v318 = vunpack.c.l.b16 %v27
  %v319 = vunpack.c.l.b16 %v28
  %v320 = vunpack.c.l.b16 %v29
  %v321 = vunpack.c.l.b16 %v30
  %v322 = vunpack.c.l.b16 %v31
  %v323 = vunpack.c.l.b16 %v32
  %v324 = vunpack.c.l.b16 %v33
  %v325 = vunpack.c.l.b16 %v34
  %v326 = vunpack.c.l.b16 %v35
  %v327 = vunpack.c.l.b16 %v36
  %v328 = vunpack.c.l.b16 %v37
  %v329 = vunpack.c.l.b16 %v38
  %v330 = vunpack.c.l.b16 %v39
  %v331 = vunpack.c.l.b16 %v40
  %v332 = vunpack.c.l.b16 %v41
  %v333 = vunpack.c.l.b16 %v42
  %v334 = vunpack.c.l.b16 %v43
  %v335 = vunpack.c.l.b16 %v44
  %v336 = vunpack.c.l.b16 %v45
  %v337 = vunpack.c.l.b16 %v46
  %v338 = vunpack.c.l.b16 %v47
  %v339 = vunpack.c.l.b16 %v48
  %v340 = vunpack.c.l.b16 %v49
  %v341 = vunpack.c.l.b16 %v50
  %v342 = vunpack.c.l.b16 %v51
  %v343 = vunpack.c.l.b16 %v52
  %v344 = vunpack.c.l.b16 %v53
  %v345 = vunpack.c.l.b16 %v54
  %v346 = vunpack.c.l.b16 %v55
  %v347 = vunpack.c.l.b16 %v56
  %v348 = vunpack.c.l.b16 %v57
  %v349 = vunpack.c.l.b16 %v58
  %v350 = vunpack.c.l.b16 %v59
  %v351 = vunpack.c.l.b16 %v60
  %v352 = vunpack.c.l.b16 %v61
  %v353 = vunpack.c.l.b16 %v62
  %v354 = vunpack.c.l.b16 %v63
  %v355 = vunpack.c.l.b16 %v64
  %v356 = vunpack.c.l.b16 %v65
  %v357 = vunpack.c.l.b16 %v66
  %v358 = vunpack.c.l.b16 %v67
  %v359 = vunpack.c.l.b16 %v68
  %v360 = vunpack.c.l.b16 %v69
  %v361 = vunpack.c.l.b16 %v70
  %v362 = vunpack.c.l.b16 %v71
  %v363 = vunpack.c.l.b16 %v72
  %v364 = vunpack.c.l.b16 %v73
  %v365 = vunpack.c.l.b16 %v74
  %v366 = vunpack.c.l.b16 %v75
  %v367 = vunpack.c.l.b16 %v76
  %v368 = vunpack.c.l.b16 %v77
  %v369 = vunpack.c.l.b16 %v78
  %v370 = vunpack.c.l.b16 %v79
  %v371 = vunpack.c.l.b16 %v80
  %v372 = vunpack.c.l.b16 %v81
  %v373 = vunpack.c.l.b16 %v82
  %v374 = vunpack.c.l.b16 %v83
  %v375 = vunpack.c.l.b16 %v84
  %v376 = vunpack.c.l.b16 %v85
  %v377 = vunpack.c.l.b16 %v86
  %v378 = vunpack.c.l.b16 %v87
  %v379 = vunpack.c.l.b16 %v88
  %v380 = vunpack.c.l.b16 %v89
  %v381 = vunpack.c.l.b16 %v90
  %v382 = vunpack.c.l.b16 %v91
  %v383 = vunpack.c.l.b16 %v92
  %v384 = vunpack.c.l.b16 %v93
  %v385 = vunpack.c.l.b16 %v94
  %v386 = vunpack.c.l.b16 %v95
  %v387 = vunpack.c.l.b16 %v96
  %v388 = vunpack.c.l.b16 %v97
  %v389 = vunpack.c.l.b16 %v98
  %v390 = vunpack.c.l.b16 %v99
  %v391 = vunpack.c.l.b16 %v100
  %v392 = vunpack.c.l.b16 %v101
  %v393 = vunpack.c.l.b16 %v102
  %v394 = vunpack.c.l.b16 %v103
  %v395 = vunpack.c.l.b16 %v104
  %v396 = vunpack.c.l.b16 %v105
  %v397 = vunpack.c.l.b16 %v106
  %v398 = vunpack.c.l.b16 %v107
  %v399 = vunpack.c.l.b16 %v108
  %v400 = vunpack.c.l.b16 %v109
  %v401 = vunpack.c.l.b16 %v110
  %v402 = vunpack.c.l.b16 %v111
  %v403 = vunpack.c.l.b16 %v112
  %v404 = vunpack.c.l.b16 %v113
  %v405 = vunpack.c.l.b16 %v114
  %v406 = vunpack.c.l.b16 %v115
  %v407 = vunpack.c.l.b16 %v116
  %v408 = vunpack.c.l.b16 %v117
  %v409 = vunpack.c.l.b16 %v118
  %v410 = vunpack.c.l.b16 %v119
  %v411 = vunpack.c.l.b16 %v120
  %v412 = vunpack.c.l.b16 %v121
  %v413 = vunpack.c.l.b16 %v122
  %v414 = vunpack.c.l.b16 %v123
  %v415 = vunpack.c.l.b16 %v124
  %v416 = vunpack.c.l.b16 %v125
  %v417 = vunpack.c.l.b16 %v126
  %v418 = vunpack.c.l.b16 %v127
  %v419 = vunpack.c.l.b16 %v128
  %v420 = vunpack.c.l.b16 %v129
  %v421 = vunpack.c.l.b16 %v130
  %v422 = vunpack.c.l.b16 %v131
  %v423 = vunpack.c.l.b16 %v132
  %v424 = vunpack.c.l.b16 %v133
  %v425 = vunpack.c.l.b16 %v134
  %v426 = vunpack.c.l.b16 %v135
  %v427 = vunpack.c.l.b16 %v136
  %v428 = vunpack.c.l.b16 %v137
  %v429 = vunpack.c.l.b16 %v138
  %v430 = vunpack.c.l.b16 %v139
  %v431 = vunpack.c.l.b16 %v140
  %v432 = vunpack.c.l.b16 %v141
  %v433 = vunpack.c.l.b16 %v142
  %v434 = vunpack.c.l.b16 %v143
  %v435 = vunpack.c.l.b16 %v144
  %v436 = vunpack.c.l.b16 %v145
  %v437 = vunpack.c.l.b16 %v146
  %v438 = vunpack.c.l.b16 %v147
  %v439 = vunpack.c.l.b16 %v148
  %v440 = vunpack.c.l.b16 %v149
  %v441 = vunpack.c.l.b16 %v150
  %v442 = vunpack.c.l.b16 %v151
  %v443 = vunpack.c.l.b16 %v152
  %v444 = vunpack.c.l.b16 %v153
  %v445 = vunpack.c.l.b16 %v154
  %v446 = vpack.c.b16 %v319, %v318
  %v447 = vpack.c.b16 %v321, %v320
  %v448 = vpack.c.b16 %v323, %v322
  %v449 = vpack.c.b16 %v325, %v324
  %v450 = vpack.c.b16 %v327, %v326
  %v451 = vpack.c.b16 %v329, %v328
  %v452 = vpack.c.b16 %v331, %v330
  %v453 = vpack.c.b16 %v333, %v332
  %v454 = vpack.c.b16 %v335, %v334
  %v455 = vpack.c.b16 %v337, %v336
  %v456 = vpack.c.b16 %v339, %v338
  %v457 = vpack.c.b16 %v341, %v340
  %v458 = vpack.c.b16 %v343, %v342
  %v459 = vpack.c.b16 %v345, %v344
  %v460 = vpack.c.b16 %v347, %v346
  %v461 = vpack.c.b16 %v349, %v348
  %v462 = vpack.c.b16 %v351, %v350
  %v463 = vpack.c.b16 %v353, %v352
  %v464 = vpack.c.b16 %v355, %v354
  %v465 = vpack.c.b16 %v357, %v356
  %v466 = vpack.c.b16 %v359, %v358
  %v467 = vpack.c.b16 %v361, %v360
  %v468 = vpack.c.b16 %v363, %v362
  %v469 = vpack.c.b16 %v365, %v364
  %v470 = vpack.c.b16 %v367, %v366
  %v471 = vpack.c.b16 %v369, %v368
  %v472 = vpack.c.b16 %v371, %v370
  %v473 = vpack.c.b16 %v373, %v372
  %v474 = vpack.c.b16 %v375, %v374
  %v475 = vpack.c.b16 %v377, %v376
  %v476 = vpack.c.b16 %v379, %v378
  %v477 = vpack.c.b16 %v381, %v380
  %v478 = vpack.c.b16 %v383, %v382
  %v479 = vpack.c.b16 %v385, %v384
  %v480 = vpack.c.b16 %v387, %v386
  %v481 = vpack.c.b16 %v389, %v388
  %v482 = vpack.c.b16 %v391, %v390
  %v483 = vpack.c.b16 %v393, %v392
  %v484 = vpack.c.b16 %v395, %v394
  %v485 = vpack.c.b16 %v397, %v396
  %v486 = vpack.c.b16 %v399, %v398
  %v487 = vpack.c.b16 %v401, %v400
  %v488 = vpack.c.b16 %v403, %v402
  %v489 = vpack.c.b16 %v405, %v404
  %v490 = vpack.c.b16 %v407, %v406
  %v491 = vpack.c.b16 %v409, %v408
  %v492 = vpack.c.b16 %v411, %v410
  %v493 = vpack.c.b16 %v413, %v412
  %v494 = vpack.c.b16 %v415, %v414
  %v495 = vpack.c.b16 %v417, %v416
  %v496 = vpack.c.b16 %v419, %v418
  %v497 = vpack.c.b16 %v421, %v420
  %v498 = vpack.c.b16 %v423, %v422
  %v499 = vpack.c.b16 %v425, %v424
  %v500 = vpack.c.b16 %v427, %v426
  %v501 = vpack.c.b16 %v429, %v428
  %v502 = vpack.c.b16 %v431, %v430
  %v503 = vpack.c.b16 %v433, %v432
  %v504 = vpack.c.b16 %v435, %v434
  %v505 = vpack.c.b16 %v437, %v436
  %v506 = vpack.c.b16 %v439, %v438
  %v507 = vpack.c.b16 %v441, %v440
  %v508 = vpack.c.b16 %v443, %v442
  %v509 = vpack.c.b16 %v445, %v444
  %574 = vmatprep.subr.bf16.mxu0 0
  %575 = vmatpush1.bf16.msra.mxu0 %v446
  %576 = vmatprep.subr.bf16.mxu0 0
  %577 = vmatpush1.bf16.msra.mxu0 %v447
  %578 = vmatprep.subr.bf16.mxu0 0
  %579 = vmatpush1.bf16.msra.mxu0 %v448
  %580 = vmatprep.subr.bf16.mxu0 0
  %581 = vmatpush1.bf16.msra.mxu0 %v449
  %582 = vmatprep.subr.bf16.mxu0 0
  %583 = vmatpush1.bf16.msra.mxu0 %v450
  %584 = vmatprep.subr.bf16.mxu0 0
  %585 = vmatpush1.bf16.msra.mxu0 %v451
  %586 = vmatprep.subr.bf16.mxu0 0
  %587 = vmatpush1.bf16.msra.mxu0 %v452
  %588 = vmatprep.subr.bf16.mxu0 0
  %589 = vmatpush1.bf16.msra.mxu0 %v453
  %590 = vmatprep.subr.bf16.mxu0 0
  %591 = vmatpush1.bf16.msra.mxu0 %v454
  %592 = vmatprep.subr.bf16.mxu0 0
  %593 = vmatpush1.bf16.msra.mxu0 %v455
  %594 = vmatprep.subr.bf16.mxu0 0
  %595 = vmatpush1.bf16.msra.mxu0 %v456
  %596 = vmatprep.subr.bf16.mxu0 0
  %597 = vmatpush1.bf16.msra.mxu0 %v457
  %598 = vmatprep.subr.bf16.mxu0 0
  %599 = vmatpush1.bf16.msra.mxu0 %v458
  %600 = vmatprep.subr.bf16.mxu0 0
  %601 = vmatpush1.bf16.msra.mxu0 %v459
  %602 = vmatprep.subr.bf16.mxu0 0
  %603 = vmatpush1.bf16.msra.mxu0 %v460
  %604 = vmatprep.subr.bf16.mxu0 0
  %605 = vmatpush1.bf16.msra.mxu0 %v461
  %606 = vmatprep.mubr.bf16.mxu0 %v175
  %607 = vmatmul.mubr.bf16.gmra.mrb[0].mxu0 %v174
  %v608 = vpop.f32.mrb[0].mxu0
  %v609 = vadd.f32 %v160, %v608
  %v610 = vpop.f32.mrb[0].mxu0
  %v611 = vpop.f32.mrb[0].mxu0
  %v612 = vpop.f32.mrb[0].mxu0
  %613 = vdwg.mxu0
  %614 = vmatprep.subr.bf16.mxu0 0
  %615 = vmatpush1.bf16.msra.mxu0 %v462
  %616 = vmatprep.subr.bf16.mxu0 0
  %617 = vmatpush1.bf16.msra.mxu0 %v463
  %618 = vmatprep.subr.bf16.mxu0 0
  %619 = vmatpush1.bf16.msra.mxu0 %v464
  %620 = vmatprep.subr.bf16.mxu0 0
  %621 = vmatpush1.bf16.msra.mxu0 %v465
  %622 = vmatprep.subr.bf16.mxu0 0
  %623 = vmatpush1.bf16.msra.mxu0 %v466
  %624 = vmatprep.subr.bf16.mxu0 0
  %625 = vmatpush1.bf16.msra.mxu0 %v467
  %626 = vmatprep.subr.bf16.mxu0 0
  %627 = vmatpush1.bf16.msra.mxu0 %v468
  %628 = vmatprep.subr.bf16.mxu0 0
  %629 = vmatpush1.bf16.msra.mxu0 %v469
  %630 = vmatprep.subr.bf16.mxu0 0
  %631 = vmatpush1.bf16.msra.mxu0 %v470
  %632 = vmatprep.subr.bf16.mxu0 0
  %633 = vmatpush1.bf16.msra.mxu0 %v471
  %634 = vmatprep.subr.bf16.mxu0 0
  %635 = vmatpush1.bf16.msra.mxu0 %v472
  %636 = vmatprep.subr.bf16.mxu0 0
  %637 = vmatpush1.bf16.msra.mxu0 %v473
  %638 = vmatprep.subr.bf16.mxu0 0
  %639 = vmatpush1.bf16.msra.mxu0 %v474
  %640 = vmatprep.subr.bf16.mxu0 0
  %641 = vmatpush1.bf16.msra.mxu0 %v475
  %642 = vmatprep.subr.bf16.mxu0 0
  %643 = vmatpush1.bf16.msra.mxu0 %v476
  %644 = vmatprep.subr.bf16.mxu0 0
  %645 = vmatpush1.bf16.msra.mxu0 %v477
  %646 = vmatprep.mubr.bf16.mxu0 %v177
  %647 = vmatmul.mubr.bf16.gmra.mrb[0].mxu0 %v176
  %v648 = vpop.f32.mrb[0].mxu0
  %v649 = vadd.f32 %v609, %v648
  %v650 = vpop.f32.mrb[0].mxu0
  %v651 = vpop.f32.mrb[0].mxu0
  %v652 = vpop.f32.mrb[0].mxu0
  %653 = vdwg.mxu0
  %654 = vmatprep.subr.bf16.mxu0 0
  %655 = vmatpush1.bf16.msra.mxu0 %v478
  %656 = vmatprep.subr.bf16.mxu0 0
  %657 = vmatpush1.bf16.msra.mxu0 %v479
  %658 = vmatprep.subr.bf16.mxu0 0
  %659 = vmatpush1.bf16.msra.mxu0 %v480
  %660 = vmatprep.subr.bf16.mxu0 0
  %661 = vmatpush1.bf16.msra.mxu0 %v481
  %662 = vmatprep.subr.bf16.mxu0 0
  %663 = vmatpush1.bf16.msra.mxu0 %v482
  %664 = vmatprep.subr.bf16.mxu0 0
  %665 = vmatpush1.bf16.msra.mxu0 %v483
  %666 = vmatprep.subr.bf16.mxu0 0
  %667 = vmatpush1.bf16.msra.mxu0 %v484
  %668 = vmatprep.subr.bf16.mxu0 0
  %669 = vmatpush1.bf16.msra.mxu0 %v485
  %670 = vmatprep.subr.bf16.mxu0 0
  %671 = vmatpush1.bf16.msra.mxu0 %v486
  %672 = vmatprep.subr.bf16.mxu0 0
  %673 = vmatpush1.bf16.msra.mxu0 %v487
  %674 = vmatprep.subr.bf16.mxu0 0
  %675 = vmatpush1.bf16.msra.mxu0 %v488
  %676 = vmatprep.subr.bf16.mxu0 0
  %677 = vmatpush1.bf16.msra.mxu0 %v489
  %678 = vmatprep.subr.bf16.mxu0 0
  %679 = vmatpush1.bf16.msra.mxu0 %v490
  %680 = vmatprep.subr.bf16.mxu0 0
  %681 = vmatpush1.bf16.msra.mxu0 %v491
  %682 = vmatprep.subr.bf16.mxu0 0
  %683 = vmatpush1.bf16.msra.mxu0 %v492
  %684 = vmatprep.subr.bf16.mxu0 0
  %685 = vmatpush1.bf16.msra.mxu0 %v493
  %686 = vmatprep.mubr.bf16.mxu0 %v179
  %687 = vmatmul.mubr.bf16.gmra.mrb[0].mxu0 %v178
  %v688 = vpop.f32.mrb[0].mxu0
  %v689 = vadd.f32 %v649, %v688
  %v690 = vpop.f32.mrb[0].mxu0
  %v691 = vpop.f32.mrb[0].mxu0
  %v692 = vpop.f32.mrb[0].mxu0
  %693 = vdwg.mxu0
  %694 = vmatprep.subr.bf16.mxu0 0
  %695 = vmatpush1.bf16.msra.mxu0 %v494
  %696 = vmatprep.subr.bf16.mxu0 0
  %697 = vmatpush1.bf16.msra.mxu0 %v495
  %698 = vmatprep.subr.bf16.mxu0 0
  %699 = vmatpush1.bf16.msra.mxu0 %v496
  %700 = vmatprep.subr.bf16.mxu0 0
  %701 = vmatpush1.bf16.msra.mxu0 %v497
  %702 = vmatprep.subr.bf16.mxu0 0
  %703 = vmatpush1.bf16.msra.mxu0 %v498
  %704 = vmatprep.subr.bf16.mxu0 0
  %705 = vmatpush1.bf16.msra.mxu0 %v499
  %706 = vmatprep.subr.bf16.mxu0 0
  %707 = vmatpush1.bf16.msra.mxu0 %v500
  %708 = vmatprep.subr.bf16.mxu0 0
  %709 = vmatpush1.bf16.msra.mxu0 %v501
  %710 = vmatprep.subr.bf16.mxu0 0
  %711 = vmatpush1.bf16.msra.mxu0 %v502
  %712 = vmatprep.subr.bf16.mxu0 0
  %713 = vmatpush1.bf16.msra.mxu0 %v503
  %714 = vmatprep.subr.bf16.mxu0 0
  %715 = vmatpush1.bf16.msra.mxu0 %v504
  %716 = vmatprep.subr.bf16.mxu0 0
  %717 = vmatpush1.bf16.msra.mxu0 %v505
  %718 = vmatprep.subr.bf16.mxu0 0
  %719 = vmatpush1.bf16.msra.mxu0 %v506
  %720 = vmatprep.subr.bf16.mxu0 0
  %721 = vmatpush1.bf16.msra.mxu0 %v507
  %722 = vmatprep.subr.bf16.mxu0 0
  %723 = vmatpush1.bf16.msra.mxu0 %v508
  %724 = vmatprep.subr.bf16.mxu0 0
  %725 = vmatpush1.bf16.msra.mxu0 %v509
  %726 = vmatprep.mubr.bf16.mxu0 %v181
  %727 = vmatmul.mubr.bf16.gmra.mrb[0].mxu0 %v180
  %v728 = vpop.f32.mrb[0].mxu0
  %v729 = vadd.f32 %v689, %v728
  %v730 = vpop.f32.mrb[0].mxu0
  %v731 = vpop.f32.mrb[0].mxu0
  %v732 = vpop.f32.mrb[0].mxu0
  %733 = vdwg.mxu0
  %v734 = vmax.f32 %v729, 0.0
  %v735 = vld [vmem:[%s3] sm:$0x1]
  %v737 = vlaneseq
  %v738 = vshrl.u32 %v737, 7
  %v739 = vsub.s32 0, %v738
  %v740 = vrot.slane %v735, %v739
  %v742 = vmul.f32 %v734, %v740
  %743 = vadd.xlane.f32.xlu0 %v742
  %v744 = vpop.xlane.xlu0 %743
  %v745 = vld [vmem:[#allocation2] sm:$0x1]
  %v747 = vlaneseq
  %v748 = vshrl.u32 %v747, 7
  %v749 = vsub.s32 0, %v748
  %v750 = vrot.slane %v745, %v749
  %v752 = vadd.f32 %v744, %v750
  %vm753 = vcmask 7168
  %754 = vst.msk [vmem:[%s5] sm:$0xff] %vm753, %v752
  // Predicated region
  $region22: #{mlp_forward.1} parent=0 // pred_check
    _
  $region23: #{mlp_forward.1} parent=0 // pred_check_branch
    %756 = sbr.rel (0) target = $region25
  $region24: #{mlp_forward.1} parent=0 // pred_region
    _
  $region25: #{mlp_forward.1} parent=0 // pred_fallthru
    _
  // Predicated region
  $region26: #{mlp_forward.1} parent=0 // pred_check
    _
  $region27: #{mlp_forward.1} parent=0 // pred_check_branch
    %758 = sbr.rel (0) target = $region29
  $region28: #{mlp_forward.1} parent=0 // pred_region
    _
  $region29: #{mlp_forward.1} parent=0 // pred_fallthru
    _

</llo_original>
